<compile_context>
chip_gen: v5e
topology: v5e:2x2
jax: 0.10.0
libtpu: 0.0.40
codegen_flags: <defaults>
</compile_context>

<pallas_src>
import functools

import jax
import jax.numpy as jnp
from jax.experimental import pallas as pl
from jax.experimental.pallas import tpu as pltpu

HID = 24        # hidden width of the DQN
K_PAD = 16      # padded state_size   (full bf16 sublane tile)
HID_PAD = 128   # padded hidden width (lane width)
A_PAD = 8       # padded action rows  (f32 sublane tile)
LANE = 128


def _round_up(n, m):
    return ((n + m - 1) // m) * m


def _dqn_kernel(action_size,
                xt_ref, w1_ref, b1_ref, w2_ref, b2_ref, w3_ref, b3_ref,
                qt_ref, act_ref):
    """One batch tile, transposed (feature-major) domain.

    xt_ref : (K_PAD, TB)        bf16   x^T, padded state rows are 0
    w1_ref : (HID_PAD, K_PAD)   bf16   fc1.weight^T padded (out, in)
    b1_ref : (HID_PAD, 1)       f32
    w2_ref : (HID_PAD, HID_PAD) bf16
    b2_ref : (HID_PAD, 1)       f32
    w3_ref : (A_PAD, HID_PAD)   bf16   only rows < action_size are non-zero
    b3_ref : (A_PAD, 1)         f32
    qt_ref : (A_PAD, TB)        f32    Q^T (rows >= action_size are exactly 0)
    act_ref: (1, TB)            int32  greedy action per batch column
    """
    xt = xt_ref[...]

    # bf16 MXU matmuls with f32 accumulation; bias add / relu in f32.
    h1 = jnp.dot(w1_ref[...], xt, preferred_element_type=jnp.float32) + b1_ref[...]
    h1 = jnp.maximum(h1, 0.0).astype(jnp.bfloat16)

    h2 = jnp.dot(w2_ref[...], h1, preferred_element_type=jnp.float32) + b2_ref[...]
    h2 = jnp.maximum(h2, 0.0).astype(jnp.bfloat16)

    q = jnp.dot(w3_ref[...], h2, preferred_element_type=jnp.float32) + b3_ref[...]
    qt_ref[...] = q                     # (8, TB): full-width unmasked stores

    # Fused greedy action: mask padded action rows, argmax == min index of max.
    # NOTE(tie-break): matches jnp.argmax (lowest index) for finite Q; if Q has
    # NaN this yields A_PAD (out of range) instead of the NaN's index.
    row = jax.lax.broadcasted_iota(jnp.int32, q.shape, 0)
    q_m = jnp.where(row < action_size, q, -jnp.inf)
    q_max = jnp.max(q_m, axis=0, keepdims=True)
    idx = jnp.where(q_m == q_max, row.astype(jnp.float32), jnp.float32(A_PAD))
    act_ref[...] = jnp.min(idx, axis=0, keepdims=True).astype(jnp.int32)


@functools.partial(jax.jit, static_argnames=("action_size", "tb_max"))
def dqn_forward(x, padded_params, *, action_size, tb_max=4096):
    """x: (B, state_size) f32. Returns (q[B, action_size] f32, action[B] i32)."""
    w1, b1 = padded_params["fc1"]   # (128, 16) bf16, (128, 1) f32
    w2, b2 = padded_params["fc2"]   # (128, 128) bf16, (128, 1) f32
    w3, b3 = padded_params["out"]   # (8, 128) bf16,  (8, 1) f32

    B, S = x.shape

    # Right-size the batch tile: <= tb_max lanes, >= 2 grid steps when the
    # batch is large enough to split across v7x's 2 TensorCores, minimal pad.
    n_tiles = pl.cdiv(B, tb_max)
    if B > LANE:
        n_tiles = max(n_tiles, 2)
    TB = _round_up(pl.cdiv(B, n_tiles), LANE)
    B_pad = n_tiles * TB

    # x^T embedded in a zero (K_PAD, B_pad) bf16 slab (one small fused XLA op;
    # padded rows/columns are numerically inert because matching weights are 0).
    xt = jnp.zeros((K_PAD, B_pad), jnp.bfloat16).at[:S, :B].set(
        x.T.astype(jnp.bfloat16))

    batch_map = lambda i: (0, i)
    pinned = lambda i: (0, 0)            # weights stay resident in VMEM

    flops = 2 * B_pad * (K_PAD * HID_PAD + HID_PAD * HID_PAD + HID_PAD * A_PAD)
    bytes_accessed = (xt.size * 2
                      + (w1.size + w2.size + w3.size) * 2
                      + (b1.size + b2.size + b3.size) * 4
                      + A_PAD * B_pad * 4 + B_pad * 4)

    qt, act = pl.pallas_call(
        functools.partial(_dqn_kernel, action_size),
        out_shape=(
            jax.ShapeDtypeStruct((A_PAD, B_pad), jnp.float32),
            jax.ShapeDtypeStruct((1, B_pad), jnp.int32),
        ),
        grid_spec=pltpu.PrefetchScalarGridSpec(
            num_scalar_prefetch=0,
            grid=(n_tiles,),
            in_specs=[
                pl.BlockSpec((K_PAD, TB), batch_map),        # x^T tile
                pl.BlockSpec((HID_PAD, K_PAD), pinned),      # w1^T
                pl.BlockSpec((HID_PAD, 1), pinned),          # b1
                pl.BlockSpec((HID_PAD, HID_PAD), pinned),    # w2^T
                pl.BlockSpec((HID_PAD, 1), pinned),          # b2
                pl.BlockSpec((A_PAD, HID_PAD), pinned),      # w3^T
                pl.BlockSpec((A_PAD, 1), pinned),            # b3
            ],
            out_specs=(
                pl.BlockSpec((A_PAD, TB), batch_map),        # Q^T (lane-dense)
                pl.BlockSpec((1, TB), batch_map),            # greedy action
            ),
        ),
        compiler_params=pltpu.CompilerParams(
            dimension_semantics=("parallel",),               # 2 TCs on v7x
        ),
        cost_estimate=pl.CostEstimate(
            flops=flops, transcendentals=0, bytes_accessed=bytes_accessed),
    )(xt, w1, b1, w2, b2, w3, b3)

    return qt[:action_size, :B].T, act[0, :B]


def init_params(key, state_size, action_size):
    """PyTorch-style Linear init (uniform +/- 1/sqrt(fan_in)); W stored (in, out)."""
    def linear(k, fan_in, fan_out):
        kw, kb = jax.random.split(k)
        bound = 1.0 / jnp.sqrt(jnp.float32(fan_in))
        w = jax.random.uniform(kw, (fan_in, fan_out), jnp.float32, -bound, bound)
        b = jax.random.uniform(kb, (fan_out,), jnp.float32, -bound, bound)
        return w, b

    k1, k2, k3 = jax.random.split(key, 3)
    return {
        "fc1": linear(k1, state_size, HID),
        "fc2": linear(k2, HID, HID),
        "out": linear(k3, HID, action_size),
    }


def pad_params(params):
    """One-time transpose + zero-pad to MXU-friendly tiles.

    Weights become bf16 with shape (out_pad, in_pad); biases stay f32
    (out_pad, 1). Padded rows/columns are exactly zero (numerically inert)."""
    def pad_t(w, b, out_pad, in_pad):
        wt = jnp.zeros((out_pad, in_pad), jnp.float32)
        wt = wt.at[: w.shape[1], : w.shape[0]].set(w.T)
        bt = jnp.zeros((out_pad, 1), jnp.float32).at[: b.shape[0], 0].set(b)
        return wt.astype(jnp.bfloat16), bt

    return {
        "fc1": pad_t(*params["fc1"], HID_PAD, K_PAD),
        "fc2": pad_t(*params["fc2"], HID_PAD, HID_PAD),
        "out": pad_t(*params["out"], A_PAD, HID_PAD),
    }


def _reference_f32(x, params):
    """Pure f32 reference (PyTorch semantics)."""
    (w1, b1), (w2, b2), (w3, b3) = params["fc1"], params["fc2"], params["out"]
    hp = jax.lax.Precision.HIGHEST
    h = jnp.maximum(jnp.dot(x, w1, precision=hp) + b1, 0.0)
    h = jnp.maximum(jnp.dot(h, w2, precision=hp) + b2, 0.0)
    return jnp.dot(h, w3, precision=hp) + b3


def _reference_bf16(x, params):
    """Reference with the kernel's numerics: bf16 operands, f32 accumulation."""
    bf = lambda a: a.astype(jnp.bfloat16).astype(jnp.float32)
    (w1, b1), (w2, b2), (w3, b3) = params["fc1"], params["fc2"], params["out"]
    hp = jax.lax.Precision.HIGHEST
    h = jnp.maximum(jnp.dot(bf(x), bf(w1), precision=hp) + b1, 0.0)
    h = jnp.maximum(jnp.dot(bf(h), bf(w2), precision=hp) + b2, 0.0)
    return jnp.dot(bf(h), bf(w3), precision=hp) + b3


if __name__ == "__main__":
    # CartPole-v1: state_size=4, action_size=2. Small batch of 8.
    state_size, action_size, batch = 4, 2, 8

    key = jax.random.PRNGKey(0)
    k_params, k_x = jax.random.split(key)
    raw_params = init_params(k_params, state_size, action_size)
    padded_params = pad_params(raw_params)
    x = jax.random.normal(k_x, (batch, state_size), jnp.float32)

    q, act = dqn_forward(x, padded_params, action_size=action_size)
    jax.block_until_ready((q, act))

    assert q.shape == (batch, action_size) and q.dtype == jnp.float32
    assert act.shape == (batch,) and act.dtype == jnp.int32

    # Tight check vs. a reference with identical numerics (bf16 operands, f32
    # accumulation), plus a loose sanity check vs. the pure-f32 reference.
    ref_bf16 = _reference_bf16(x, raw_params)
    ref_f32 = _reference_f32(x, raw_params)
    assert jnp.allclose(q, ref_bf16, atol=1e-3, rtol=1e-3), \
        float(jnp.max(jnp.abs(q - ref_bf16)))
    assert jnp.allclose(q, ref_f32, atol=1e-1, rtol=1e-1)
    # Fused greedy action must agree with argmax of the returned Q values.
    assert jnp.array_equal(act, jnp.argmax(q, axis=-1).astype(jnp.int32))

    print("KERNEL_OK")
</pallas_src>

<mosaic_0001>
module attributes {stable_mosaic.version = 11 : i64} {
  func.func @_dqn_kernel(%arg0: i32, %arg1: memref<16x128xbf16, #tpu.memory_space<vmem>>, %arg2: memref<128x16xbf16, #tpu.memory_space<vmem>>, %arg3: memref<128x1xf32, #tpu.memory_space<vmem>>, %arg4: memref<128x128xbf16, #tpu.memory_space<vmem>>, %arg5: memref<128x1xf32, #tpu.memory_space<vmem>>, %arg6: memref<8x128xbf16, #tpu.memory_space<vmem>>, %arg7: memref<8x1xf32, #tpu.memory_space<vmem>>, %arg8: memref<8x128xf32, #tpu.memory_space<vmem>>, %arg9: memref<1x128xi32, #tpu.memory_space<vmem>>) attributes {dimension_semantics = [#tpu.dimension_semantics<parallel>], iteration_bounds = array<i64: 1>, scalar_prefetch = 0 : i64, scratch_operands = 0 : i64, tpu.core_type = #tpu.core_type<tc>, window_params = [{transform_indices = @transform_0, window_bounds = array<i64: 16, 128>}, {pipeline_mode = #tpu.pipeline_mode<synchronous>, transform_indices = @transform_1, window_bounds = array<i64: 128, 16>}, {pipeline_mode = #tpu.pipeline_mode<synchronous>, transform_indices = @transform_2, window_bounds = array<i64: 128, 1>}, {pipeline_mode = #tpu.pipeline_mode<synchronous>, transform_indices = @transform_3, window_bounds = array<i64: 128, 128>}, {pipeline_mode = #tpu.pipeline_mode<synchronous>, transform_indices = @transform_4, window_bounds = array<i64: 128, 1>}, {pipeline_mode = #tpu.pipeline_mode<synchronous>, transform_indices = @transform_5, window_bounds = array<i64: 8, 128>}, {pipeline_mode = #tpu.pipeline_mode<synchronous>, transform_indices = @transform_6, window_bounds = array<i64: 8, 1>}, {transform_indices = @transform_7, window_bounds = array<i64: 8, 128>}, {transform_indices = @transform_8, window_bounds = array<i64: 1, 128>}]} {
    %c0 = arith.constant 0 : index
    %c0_0 = arith.constant 0 : index
    %0 = vector.load %arg1[%c0, %c0_0] : memref<16x128xbf16, #tpu.memory_space<vmem>>, vector<16x128xbf16>
    %c0_1 = arith.constant 0 : index
    %c0_2 = arith.constant 0 : index
    %1 = vector.load %arg2[%c0_1, %c0_2] : memref<128x16xbf16, #tpu.memory_space<vmem>>, vector<128x16xbf16>
    %cst = arith.constant dense<0.000000e+00> : vector<128x128xf32>
    %2 = tpu.matmul %1, %0, %cst {dimension_numbers = #tpu.dot_dimension_numbers<[1], [0], [0], [1], [0, 0, 1, 1], [], []>} : vector<128x16xbf16>, vector<16x128xbf16>, vector<128x128xf32> -> vector<128x128xf32>
    %c0_3 = arith.constant 0 : index
    %c0_4 = arith.constant 0 : index
    %3 = vector.load %arg3[%c0_3, %c0_4] : memref<128x1xf32, #tpu.memory_space<vmem>>, vector<128x1xf32>
    %4 = vector.broadcast %3 : vector<128x1xf32> to vector<128x128xf32>
    %5 = arith.addf %2, %4 : vector<128x128xf32>
    %cst_5 = arith.constant 0.000000e+00 : f32
    %6 = vector.broadcast %cst_5 : f32 to vector<128x128xf32>
    %7 = arith.maximumf %5, %6 : vector<128x128xf32>
    %8 = arith.truncf %7 : vector<128x128xf32> to vector<128x128xbf16>
    %c0_6 = arith.constant 0 : index
    %c0_7 = arith.constant 0 : index
    %9 = vector.load %arg4[%c0_6, %c0_7] : memref<128x128xbf16, #tpu.memory_space<vmem>>, vector<128x128xbf16>
    %cst_8 = arith.constant dense<0.000000e+00> : vector<128x128xf32>
    %10 = tpu.matmul %9, %8, %cst_8 {dimension_numbers = #tpu.dot_dimension_numbers<[1], [0], [0], [1], [0, 0, 1, 1], [], []>} : vector<128x128xbf16>, vector<128x128xbf16>, vector<128x128xf32> -> vector<128x128xf32>
    %c0_9 = arith.constant 0 : index
    %c0_10 = arith.constant 0 : index
    %11 = vector.load %arg5[%c0_9, %c0_10] : memref<128x1xf32, #tpu.memory_space<vmem>>, vector<128x1xf32>
    %12 = vector.broadcast %11 : vector<128x1xf32> to vector<128x128xf32>
    %13 = arith.addf %10, %12 : vector<128x128xf32>
    %cst_11 = arith.constant 0.000000e+00 : f32
    %14 = vector.broadcast %cst_11 : f32 to vector<128x128xf32>
    %15 = arith.maximumf %13, %14 : vector<128x128xf32>
    %16 = arith.truncf %15 : vector<128x128xf32> to vector<128x128xbf16>
    %c0_12 = arith.constant 0 : index
    %c0_13 = arith.constant 0 : index
    %17 = vector.load %arg6[%c0_12, %c0_13] : memref<8x128xbf16, #tpu.memory_space<vmem>>, vector<8x128xbf16>
    %cst_14 = arith.constant dense<0.000000e+00> : vector<8x128xf32>
    %18 = tpu.matmul %17, %16, %cst_14 {dimension_numbers = #tpu.dot_dimension_numbers<[1], [0], [0], [1], [0, 0, 1, 1], [], []>} : vector<8x128xbf16>, vector<128x128xbf16>, vector<8x128xf32> -> vector<8x128xf32>
    %c0_15 = arith.constant 0 : index
    %c0_16 = arith.constant 0 : index
    %19 = vector.load %arg7[%c0_15, %c0_16] : memref<8x1xf32, #tpu.memory_space<vmem>>, vector<8x1xf32>
    %20 = vector.broadcast %19 : vector<8x1xf32> to vector<8x128xf32>
    %21 = arith.addf %18, %20 : vector<8x128xf32>
    %c0_17 = arith.constant 0 : index
    %c0_18 = arith.constant 0 : index
    %22 = vector.load %arg8[%c0_17, %c0_18] : memref<8x128xf32, #tpu.memory_space<vmem>>, vector<8x128xf32>
    tpu.vector_store %arg8[%c0_17, %c0_18], %21 {strides = array<i32>} : memref<8x128xf32, #tpu.memory_space<vmem>>, vector<8x128xf32>,
    %23 = tpu.iota {dimensions = array<i32: 0>} : vector<8x128xi32>
    %c2_i32 = arith.constant 2 : i32
    %24 = vector.broadcast %c2_i32 : i32 to vector<8x128xi32>
    %25 = arith.cmpi slt, %23, %24 : vector<8x128xi32>
    %cst_19 = arith.constant 0xFF800000 : f32
    %26 = vector.broadcast %cst_19 : f32 to vector<8x128xf32>
    %27 = arith.select %25, %21, %26 : vector<8x128xi1>, vector<8x128xf32>
    %cst_20 = arith.constant dense<0xFF800000> : vector<128xf32>
    %28 = vector.multi_reduction <maximumf>, %27, %cst_20 [0] : vector<8x128xf32> to vector<128xf32>
    %29 = vector.shape_cast %28 : vector<128xf32> to vector<1x128xf32>
    %30 = vector.broadcast %29 : vector<1x128xf32> to vector<8x128xf32>
    %31 = arith.cmpf oeq, %27, %30 : vector<8x128xf32>
    %32 = arith.sitofp %23 : vector<8x128xi32> to vector<8x128xf32>
    %cst_21 = arith.constant 8.000000e+00 : f32
    %33 = vector.broadcast %cst_21 : f32 to vector<8x128xf32>
    %34 = arith.select %31, %32, %33 : vector<8x128xi1>, vector<8x128xf32>
    %cst_22 = arith.constant dense<0x7F800000> : vector<128xf32>
    %35 = vector.multi_reduction <minimumf>, %34, %cst_22 [0] : vector<8x128xf32> to vector<128xf32>
    %36 = vector.shape_cast %35 : vector<128xf32> to vector<1x128xf32>
    %37 = arith.fptosi %36 : vector<1x128xf32> to vector<1x128xi32>
    %c0_23 = arith.constant 0 : index
    %c0_24 = arith.constant 0 : index
    %38 = vector.load %arg9[%c0_23, %c0_24] : memref<1x128xi32, #tpu.memory_space<vmem>>, vector<1x128xi32>
    tpu.vector_store %arg9[%c0_23, %c0_24], %37 {strides = array<i32>} : memref<1x128xi32, #tpu.memory_space<vmem>>, vector<1x128xi32>,
    return
  }
  func.func @transform_0(%arg0: i32) -> (i32, i32) {
    %c0_i32 = arith.constant 0 : i32
    %c0_i32_0 = arith.constant 0 : i32
    return %c0_i32, %arg0 : i32, i32
  }
  func.func @transform_1(%arg0: i32) -> (i32, i32) {
    %c0_i32 = arith.constant 0 : i32
    %c0_i32_0 = arith.constant 0 : i32
    %c0_i32_1 = arith.constant 0 : i32
    return %c0_i32, %c0_i32_0 : i32, i32
  }
  func.func @transform_2(%arg0: i32) -> (i32, i32) {
    %c0_i32 = arith.constant 0 : i32
    %c0_i32_0 = arith.constant 0 : i32
    %c0_i32_1 = arith.constant 0 : i32
    return %c0_i32, %c0_i32_0 : i32, i32
  }
  func.func @transform_3(%arg0: i32) -> (i32, i32) {
    %c0_i32 = arith.constant 0 : i32
    %c0_i32_0 = arith.constant 0 : i32
    %c0_i32_1 = arith.constant 0 : i32
    return %c0_i32, %c0_i32_0 : i32, i32
  }
  func.func @transform_4(%arg0: i32) -> (i32, i32) {
    %c0_i32 = arith.constant 0 : i32
    %c0_i32_0 = arith.constant 0 : i32
    %c0_i32_1 = arith.constant 0 : i32
    return %c0_i32, %c0_i32_0 : i32, i32
  }
  func.func @transform_5(%arg0: i32) -> (i32, i32) {
    %c0_i32 = arith.constant 0 : i32
    %c0_i32_0 = arith.constant 0 : i32
    %c0_i32_1 = arith.constant 0 : i32
    return %c0_i32, %c0_i32_0 : i32, i32
  }
  func.func @transform_6(%arg0: i32) -> (i32, i32) {
    %c0_i32 = arith.constant 0 : i32
    %c0_i32_0 = arith.constant 0 : i32
    %c0_i32_1 = arith.constant 0 : i32
    return %c0_i32, %c0_i32_0 : i32, i32
  }
  func.func @transform_7(%arg0: i32) -> (i32, i32) {
    %c0_i32 = arith.constant 0 : i32
    %c0_i32_0 = arith.constant 0 : i32
    return %c0_i32, %arg0 : i32, i32
  }
  func.func @transform_8(%arg0: i32) -> (i32, i32) {
    %c0_i32 = arith.constant 0 : i32
    %c0_i32_0 = arith.constant 0 : i32
    return %c0_i32, %arg0 : i32, i32
  }
}

</mosaic_0001>

<llo_original>
// kernel: dqn_forward.1
$region0: #{dqn_forward.1}
  #allocation0 [shape = 'u32[]', space=smem, size = 0x4, offset = 0x4, fixed_abs, tag = 'smem constant byte address 0x4 - core index']
  #allocation1 [shape = 'u32[72,128]{1,0:T(1,128)}', space=vmem, size = 0x9000, scoped, tag = 'internal scratch']
  %s0 = inlined_call_operand.vmem [shape: bf16[16,128], index: 0, kind: input, shape index: {}]
  %s1 = inlined_call_operand.vmem [shape: bf16[128,16], index: 1, kind: input, shape index: {}]
  %s2 = inlined_call_operand.vmem [shape: f32[128,1], index: 2, kind: input, shape index: {}]
  %s3 = inlined_call_operand.vmem [shape: bf16[128,128], index: 3, kind: input, shape index: {}]
  %s4 = inlined_call_operand.vmem [shape: f32[128,1], index: 4, kind: input, shape index: {}]
  %s5 = inlined_call_operand.vmem [shape: bf16[8,128], index: 5, kind: input, shape index: {}]
  %s6 = inlined_call_operand.vmem [shape: f32[8,1], index: 6, kind: input, shape index: {}]
  %s7 = inlined_call_operand.vmem [shape: f32[8,128], index: 7, kind: output, shape index: {0}]
  %s8 = inlined_call_operand.vmem [shape: s32[1,128], index: 8, kind: output, shape index: {1}]
  %9 = xla_tuple %s7, %s8
  %s10 = sld [smem:[#allocation0]]
  $region46: #{dqn_forward.1} parent=0
    _
  %s12 = ssub.s32 1, %s10
  %s13 = scalar_select 0, %s12, %s10
  // Predicated region
  $region2: #{dqn_forward.1} parent=0 // pred_check
    _
  $region3: #{dqn_forward.1} parent=0 // pred_check_branch
    %15 = sbr.rel (0) target = $region5
  $region4: #{dqn_forward.1} parent=0 // pred_region
    _
  $region5: #{dqn_forward.1} parent=0 // pred_fallthru
    _
  // Predicated region
  $region6: #{dqn_forward.1} parent=0 // pred_check
    _
  $region7: #{dqn_forward.1} parent=0 // pred_check_branch
    %17 = sbr.rel (0) target = $region9
  $region8: #{dqn_forward.1} parent=0 // pred_region
    _
  $region9: #{dqn_forward.1} parent=0 // pred_fallthru
    _
  // Predicated region
  $region10: #{dqn_forward.1} parent=0 // pred_check
    _
  $region11: #{dqn_forward.1} parent=0 // pred_check_branch
    %19 = sbr.rel (0) target = $region13
  $region12: #{dqn_forward.1} parent=0 // pred_region
    _
  $region13: #{dqn_forward.1} parent=0 // pred_fallthru
    _
  // Predicated region
  $region14: #{dqn_forward.1} parent=0 // pred_check
    _
  $region15: #{dqn_forward.1} parent=0 // pred_check_branch
    %21 = sbr.rel (0) target = $region17
  $region16: #{dqn_forward.1} parent=0 // pred_region
    _
  $region17: #{dqn_forward.1} parent=0 // pred_fallthru
    _
  // Predicated region
  $region18: #{dqn_forward.1} parent=0 // pred_check
    _
  $region19: #{dqn_forward.1} parent=0 // pred_check_branch
    %23 = sbr.rel (0) target = $region21
  $region20: #{dqn_forward.1} parent=0 // pred_region
    _
  $region21: #{dqn_forward.1} parent=0 // pred_fallthru
    _
  // Predicated region
  $region22: #{dqn_forward.1} parent=0 // pred_check
    _
  $region23: #{dqn_forward.1} parent=0 // pred_check_branch
    %25 = sbr.rel (0) target = $region25
  $region24: #{dqn_forward.1} parent=0 // pred_region
    _
  $region25: #{dqn_forward.1} parent=0 // pred_fallthru
    _
  // Predicated region
  $region26: #{dqn_forward.1} parent=0 // pred_check
    _
  $region27: #{dqn_forward.1} parent=0 // pred_check_branch
    %27 = sbr.rel (0) target = $region29
  $region28: #{dqn_forward.1} parent=0 // pred_region
    _
  $region29: #{dqn_forward.1} parent=0 // pred_fallthru
    _
  %v29 = vld [vmem:[%s0] sm:$0xf]
  %v30 = vld [vmem:[%s0 + $0x4] sm:$0xf]
  %v31 = vld [vmem:[%s1] sm:$0xf]
  %v32 = vld [vmem:[%s1 + $0x4] sm:$0xf]
  %v33 = vld [vmem:[%s1 + $0x8] sm:$0xf]
  %v34 = vld [vmem:[%s1 + $0xc] sm:$0xf]
  %v35 = vld [vmem:[%s1 + $0x10] sm:$0xf]
  %v36 = vld [vmem:[%s1 + $0x14] sm:$0xf]
  %v37 = vld [vmem:[%s1 + $0x18] sm:$0xf]
  %v38 = vld [vmem:[%s1 + $0x1c] sm:$0xf]
  %v39 = vld [vmem:[%s1 + $0x20] sm:$0xf]
  %v40 = vld [vmem:[%s1 + $0x24] sm:$0xf]
  %v41 = vld [vmem:[%s1 + $0x28] sm:$0xf]
  %v42 = vld [vmem:[%s1 + $0x2c] sm:$0xf]
  %v43 = vld [vmem:[%s1 + $0x30] sm:$0xf]
  %v44 = vld [vmem:[%s1 + $0x34] sm:$0xf]
  %v45 = vld [vmem:[%s1 + $0x38] sm:$0xf]
  %v46 = vld [vmem:[%s1 + $0x3c] sm:$0xf]
  %v47 = vld [vmem:[%s2] sm:$0xff]
  %v48 = vld [vmem:[%s2 + $0x8] sm:$0xff]
  %v49 = vld [vmem:[%s2 + $0x10] sm:$0xff]
  %v50 = vld [vmem:[%s2 + $0x18] sm:$0xff]
  %v51 = vld [vmem:[%s2 + $0x20] sm:$0xff]
  %v52 = vld [vmem:[%s2 + $0x28] sm:$0xff]
  %v53 = vld [vmem:[%s2 + $0x30] sm:$0xff]
  %v54 = vld [vmem:[%s2 + $0x38] sm:$0xff]
  %v55 = vld [vmem:[%s2 + $0x40] sm:$0xff]
  %v56 = vld [vmem:[%s2 + $0x48] sm:$0xff]
  %v57 = vld [vmem:[%s2 + $0x50] sm:$0xff]
  %v58 = vld [vmem:[%s2 + $0x58] sm:$0xff]
  %v59 = vld [vmem:[%s2 + $0x60] sm:$0xff]
  %v60 = vld [vmem:[%s2 + $0x68] sm:$0xff]
  %v61 = vld [vmem:[%s2 + $0x70] sm:$0xff]
  %v62 = vld [vmem:[%s2 + $0x78] sm:$0xff]
  %64 = vset.pattern.permute.xlu0 0
  %65 = vperm.xlu0 %64, %v47
  %v66 = vpop.permute.xlu0 %65
  %69 = vset.pattern.permute.xlu0 0
  %70 = vperm.xlu0 %69, %v48
  %v71 = vpop.permute.xlu0 %70
  %74 = vset.pattern.permute.xlu0 0
  %75 = vperm.xlu0 %74, %v49
  %v76 = vpop.permute.xlu0 %75
  %79 = vset.pattern.permute.xlu0 0
  %80 = vperm.xlu0 %79, %v50
  %v81 = vpop.permute.xlu0 %80
  %84 = vset.pattern.permute.xlu0 0
  %85 = vperm.xlu0 %84, %v51
  %v86 = vpop.permute.xlu0 %85
  %89 = vset.pattern.permute.xlu0 0
  %90 = vperm.xlu0 %89, %v52
  %v91 = vpop.permute.xlu0 %90
  %94 = vset.pattern.permute.xlu0 0
  %95 = vperm.xlu0 %94, %v53
  %v96 = vpop.permute.xlu0 %95
  %99 = vset.pattern.permute.xlu0 0
  %100 = vperm.xlu0 %99, %v54
  %v101 = vpop.permute.xlu0 %100
  %104 = vset.pattern.permute.xlu0 0
  %105 = vperm.xlu0 %104, %v55
  %v106 = vpop.permute.xlu0 %105
  %109 = vset.pattern.permute.xlu0 0
  %110 = vperm.xlu0 %109, %v56
  %v111 = vpop.permute.xlu0 %110
  %114 = vset.pattern.permute.xlu0 0
  %115 = vperm.xlu0 %114, %v57
  %v116 = vpop.permute.xlu0 %115
  %119 = vset.pattern.permute.xlu0 0
  %120 = vperm.xlu0 %119, %v58
  %v121 = vpop.permute.xlu0 %120
  %124 = vset.pattern.permute.xlu0 0
  %125 = vperm.xlu0 %124, %v59
  %v126 = vpop.permute.xlu0 %125
  %129 = vset.pattern.permute.xlu0 0
  %130 = vperm.xlu0 %129, %v60
  %v131 = vpop.permute.xlu0 %130
  %134 = vset.pattern.permute.xlu0 0
  %135 = vperm.xlu0 %134, %v61
  %v136 = vpop.permute.xlu0 %135
  %139 = vset.pattern.permute.xlu0 0
  %140 = vperm.xlu0 %139, %v62
  %v141 = vpop.permute.xlu0 %140
  %v159 = vunpack.c.l.b16 %v31
  %v160 = vunpack.c.l.b16 %v32
  %v161 = vunpack.c.l.b16 %v33
  %v162 = vunpack.c.l.b16 %v34
  %v163 = vunpack.c.l.b16 %v35
  %v164 = vunpack.c.l.b16 %v36
  %v165 = vunpack.c.l.b16 %v37
  %v166 = vunpack.c.l.b16 %v38
  %v167 = vunpack.c.l.b16 %v39
  %v168 = vunpack.c.l.b16 %v40
  %v169 = vunpack.c.l.b16 %v41
  %v170 = vunpack.c.l.b16 %v42
  %v171 = vunpack.c.l.b16 %v43
  %v172 = vunpack.c.l.b16 %v44
  %v173 = vunpack.c.l.b16 %v45
  %v174 = vunpack.c.l.b16 %v46
  %v175 = vpack.c.b16 %v160, %v159
  %v176 = vpack.c.b16 %v162, %v161
  %v177 = vpack.c.b16 %v164, %v163
  %v178 = vpack.c.b16 %v166, %v165
  %v179 = vpack.c.b16 %v168, %v167
  %v180 = vpack.c.b16 %v170, %v169
  %v181 = vpack.c.b16 %v172, %v171
  %v182 = vpack.c.b16 %v174, %v173
  %v185 = vunpack.c.l.b16 %v29
  %v186 = vunpack.c.l.b16 %v30
  %v187 = vpack.c.b16 %v186, %v185
  %vm189 = vcmask 130048
  %v191 = vsel %vm189, %v175, 0
  %v194 = vsel %vm189, %v176, 0
  %v197 = vsel %vm189, %v177, 0
  %v200 = vsel %vm189, %v178, 0
  %v203 = vsel %vm189, %v179, 0
  %v206 = vsel %vm189, %v180, 0
  %v209 = vsel %vm189, %v181, 0
  %v212 = vsel %vm189, %v182, 0
  %214 = vmatpush.bf16.msra.mxu0 0
  %215 = vmatpush.bf16.msra.mxu0 0
  %216 = vmatpush.bf16.msra.mxu0 0
  %217 = vmatpush.bf16.msra.mxu0 0
  %218 = vmatpush.bf16.msra.mxu0 0
  %219 = vmatpush.bf16.msra.mxu0 0
  %220 = vmatpush.bf16.msra.mxu0 0
  %221 = vmatpush.bf16.msra.mxu0 %v187
  %222 = vmatmul.bf16.gmra.mxu0 %v191
  %v223 = vpop.f32.mrf.mxu0
  %v224 = vadd.f32 %v66, %v223
  %v225 = vpop.f32.mrf.mxu0
  %v226 = vadd.f32 %v71, %v225
  %227 = vmatmul.bf16.gmra.mxu0 %v194
  %v228 = vpop.f32.mrf.mxu0
  %v229 = vadd.f32 %v76, %v228
  %v230 = vpop.f32.mrf.mxu0
  %v231 = vadd.f32 %v81, %v230
  %232 = vmatmul.bf16.gmra.mxu0 %v197
  %v233 = vpop.f32.mrf.mxu0
  %v234 = vadd.f32 %v86, %v233
  %v235 = vpop.f32.mrf.mxu0
  %v236 = vadd.f32 %v91, %v235
  %237 = vmatmul.bf16.gmra.mxu0 %v200
  %v238 = vpop.f32.mrf.mxu0
  %v239 = vadd.f32 %v96, %v238
  %v240 = vpop.f32.mrf.mxu0
  %v241 = vadd.f32 %v101, %v240
  %242 = vmatmul.bf16.gmra.mxu0 %v203
  %v243 = vpop.f32.mrf.mxu0
  %v244 = vadd.f32 %v106, %v243
  %v245 = vpop.f32.mrf.mxu0
  %v246 = vadd.f32 %v111, %v245
  %247 = vmatmul.bf16.gmra.mxu0 %v206
  %v248 = vpop.f32.mrf.mxu0
  %v249 = vadd.f32 %v116, %v248
  %v250 = vpop.f32.mrf.mxu0
  %v251 = vadd.f32 %v121, %v250
  %252 = vmatmul.bf16.gmra.mxu0 %v209
  %v253 = vpop.f32.mrf.mxu0
  %v254 = vadd.f32 %v126, %v253
  %v255 = vpop.f32.mrf.mxu0
  %v256 = vadd.f32 %v131, %v255
  %257 = vmatmul.bf16.gmra.mxu0 %v212
  %v258 = vpop.f32.mrf.mxu0
  %v259 = vadd.f32 %v136, %v258
  %v260 = vpop.f32.mrf.mxu0
  %v261 = vadd.f32 %v141, %v260
  %262 = vdwg.mxu0
  %v263 = vmax.f32 %v224, 0.0
  %v264 = vmax.f32 %v226, 0.0
  %v265 = vmax.f32 %v229, 0.0
  %v266 = vmax.f32 %v231, 0.0
  %v267 = vmax.f32 %v234, 0.0
  %v268 = vmax.f32 %v236, 0.0
  %v269 = vmax.f32 %v239, 0.0
  %v270 = vmax.f32 %v241, 0.0
  %v271 = vmax.f32 %v244, 0.0
  %v272 = vmax.f32 %v246, 0.0
  %v273 = vmax.f32 %v249, 0.0
  %v274 = vmax.f32 %v251, 0.0
  %v275 = vmax.f32 %v254, 0.0
  %v276 = vmax.f32 %v256, 0.0
  %v277 = vmax.f32 %v259, 0.0
  %v278 = vmax.f32 %v261, 0.0
  %v279 = vpack.c.bf16 %v264, %v263
  %v280 = vpack.c.bf16 %v266, %v265
  %v281 = vpack.c.bf16 %v268, %v267
  %v282 = vpack.c.bf16 %v270, %v269
  %v283 = vpack.c.bf16 %v272, %v271
  %v284 = vpack.c.bf16 %v274, %v273
  %v285 = vpack.c.bf16 %v276, %v275
  %v286 = vpack.c.bf16 %v278, %v277
  %v287 = vld [vmem:[%s3] sm:$0xf]
  %v288 = vld [vmem:[%s3 + $0x4] sm:$0xf]
  %v289 = vld [vmem:[%s3 + $0x8] sm:$0xf]
  %v290 = vld [vmem:[%s3 + $0xc] sm:$0xf]
  %v291 = vld [vmem:[%s3 + $0x10] sm:$0xf]
  %v292 = vld [vmem:[%s3 + $0x14] sm:$0xf]
  %v293 = vld [vmem:[%s3 + $0x18] sm:$0xf]
  %v294 = vld [vmem:[%s3 + $0x1c] sm:$0xf]
  %v295 = vld [vmem:[%s3 + $0x20] sm:$0xf]
  %v296 = vld [vmem:[%s3 + $0x24] sm:$0xf]
  %v297 = vld [vmem:[%s3 + $0x28] sm:$0xf]
  %v298 = vld [vmem:[%s3 + $0x2c] sm:$0xf]
  %v299 = vld [vmem:[%s3 + $0x30] sm:$0xf]
  %v300 = vld [vmem:[%s3 + $0x34] sm:$0xf]
  %v301 = vld [vmem:[%s3 + $0x38] sm:$0xf]
  %v302 = vld [vmem:[%s3 + $0x3c] sm:$0xf]
  %v303 = vld [vmem:[%s4] sm:$0xff]
  %v304 = vld [vmem:[%s4 + $0x8] sm:$0xff]
  %v305 = vld [vmem:[%s4 + $0x10] sm:$0xff]
  %v306 = vld [vmem:[%s4 + $0x18] sm:$0xff]
  %v307 = vld [vmem:[%s4 + $0x20] sm:$0xff]
  %v308 = vld [vmem:[%s4 + $0x28] sm:$0xff]
  %v309 = vld [vmem:[%s4 + $0x30] sm:$0xff]
  %v310 = vld [vmem:[%s4 + $0x38] sm:$0xff]
  %v311 = vld [vmem:[%s4 + $0x40] sm:$0xff]
  %v312 = vld [vmem:[%s4 + $0x48] sm:$0xff]
  %v313 = vld [vmem:[%s4 + $0x50] sm:$0xff]
  %v314 = vld [vmem:[%s4 + $0x58] sm:$0xff]
  %v315 = vld [vmem:[%s4 + $0x60] sm:$0xff]
  %v316 = vld [vmem:[%s4 + $0x68] sm:$0xff]
  %v317 = vld [vmem:[%s4 + $0x70] sm:$0xff]
  %v318 = vld [vmem:[%s4 + $0x78] sm:$0xff]
  %320 = vset.pattern.permute.xlu0 0
  %321 = vperm.xlu0 %320, %v303
  %v322 = vpop.permute.xlu0 %321
  %325 = vset.pattern.permute.xlu0 0
  %326 = vperm.xlu0 %325, %v304
  %v327 = vpop.permute.xlu0 %326
  %330 = vset.pattern.permute.xlu0 0
  %331 = vperm.xlu0 %330, %v305
  %v332 = vpop.permute.xlu0 %331
  %335 = vset.pattern.permute.xlu0 0
  %336 = vperm.xlu0 %335, %v306
  %v337 = vpop.permute.xlu0 %336
  %340 = vset.pattern.permute.xlu0 0
  %341 = vperm.xlu0 %340, %v307
  %v342 = vpop.permute.xlu0 %341
  %345 = vset.pattern.permute.xlu0 0
  %346 = vperm.xlu0 %345, %v308
  %v347 = vpop.permute.xlu0 %346
  %350 = vset.pattern.permute.xlu0 0
  %351 = vperm.xlu0 %350, %v309
  %v352 = vpop.permute.xlu0 %351
  %355 = vset.pattern.permute.xlu0 0
  %356 = vperm.xlu0 %355, %v310
  %v357 = vpop.permute.xlu0 %356
  %360 = vset.pattern.permute.xlu0 0
  %361 = vperm.xlu0 %360, %v311
  %v362 = vpop.permute.xlu0 %361
  %365 = vset.pattern.permute.xlu0 0
  %366 = vperm.xlu0 %365, %v312
  %v367 = vpop.permute.xlu0 %366
  %370 = vset.pattern.permute.xlu0 0
  %371 = vperm.xlu0 %370, %v313
  %v372 = vpop.permute.xlu0 %371
  %375 = vset.pattern.permute.xlu0 0
  %376 = vperm.xlu0 %375, %v314
  %v377 = vpop.permute.xlu0 %376
  %380 = vset.pattern.permute.xlu0 0
  %381 = vperm.xlu0 %380, %v315
  %v382 = vpop.permute.xlu0 %381
  %385 = vset.pattern.permute.xlu0 0
  %386 = vperm.xlu0 %385, %v316
  %v387 = vpop.permute.xlu0 %386
  %390 = vset.pattern.permute.xlu0 0
  %391 = vperm.xlu0 %390, %v317
  %v392 = vpop.permute.xlu0 %391
  %395 = vset.pattern.permute.xlu0 0
  %396 = vperm.xlu0 %395, %v318
  %v397 = vpop.permute.xlu0 %396
  %v415 = vunpack.c.l.b16 %v287
  %v416 = vunpack.c.l.b16 %v288
  %v417 = vunpack.c.l.b16 %v289
  %v418 = vunpack.c.l.b16 %v290
  %v419 = vunpack.c.l.b16 %v291
  %v420 = vunpack.c.l.b16 %v292
  %v421 = vunpack.c.l.b16 %v293
  %v422 = vunpack.c.l.b16 %v294
  %v423 = vunpack.c.l.b16 %v295
  %v424 = vunpack.c.l.b16 %v296
  %v425 = vunpack.c.l.b16 %v297
  %v426 = vunpack.c.l.b16 %v298
  %v427 = vunpack.c.l.b16 %v299
  %v428 = vunpack.c.l.b16 %v300
  %v429 = vunpack.c.l.b16 %v301
  %v430 = vunpack.c.l.b16 %v302
  %v431 = vpack.c.b16 %v416, %v415
  %v432 = vpack.c.b16 %v418, %v417
  %v433 = vpack.c.b16 %v420, %v419
  %v434 = vpack.c.b16 %v422, %v421
  %v435 = vpack.c.b16 %v424, %v423
  %v436 = vpack.c.b16 %v426, %v425
  %v437 = vpack.c.b16 %v428, %v427
  %v438 = vpack.c.b16 %v430, %v429
  %447 = vmatpush.bf16.msra.mxu0 %v286
  %448 = vmatpush.bf16.msra.mxu0 %v285
  %449 = vmatpush.bf16.msra.mxu0 %v284
  %450 = vmatpush.bf16.msra.mxu0 %v283
  %451 = vmatpush.bf16.msra.mxu0 %v282
  %452 = vmatpush.bf16.msra.mxu0 %v281
  %453 = vmatpush.bf16.msra.mxu0 %v280
  %454 = vmatpush.bf16.msra.mxu0 %v279
  %455 = vmatmul.bf16.gmra.mxu0 %v431
  %v456 = vpop.f32.mrf.mxu0
  %v457 = vadd.f32 %v322, %v456
  %v458 = vpop.f32.mrf.mxu0
  %v459 = vadd.f32 %v327, %v458
  %460 = vmatmul.bf16.gmra.mxu0 %v432
  %v461 = vpop.f32.mrf.mxu0
  %v462 = vadd.f32 %v332, %v461
  %v463 = vpop.f32.mrf.mxu0
  %v464 = vadd.f32 %v337, %v463
  %465 = vmatmul.bf16.gmra.mxu0 %v433
  %v466 = vpop.f32.mrf.mxu0
  %v467 = vadd.f32 %v342, %v466
  %v468 = vpop.f32.mrf.mxu0
  %v469 = vadd.f32 %v347, %v468
  %470 = vmatmul.bf16.gmra.mxu0 %v434
  %v471 = vpop.f32.mrf.mxu0
  %v472 = vadd.f32 %v352, %v471
  %v473 = vpop.f32.mrf.mxu0
  %v474 = vadd.f32 %v357, %v473
  %475 = vmatmul.bf16.gmra.mxu0 %v435
  %v476 = vpop.f32.mrf.mxu0
  %v477 = vadd.f32 %v362, %v476
  %v478 = vpop.f32.mrf.mxu0
  %v479 = vadd.f32 %v367, %v478
  %480 = vmatmul.bf16.gmra.mxu0 %v436
  %v481 = vpop.f32.mrf.mxu0
  %v482 = vadd.f32 %v372, %v481
  %v483 = vpop.f32.mrf.mxu0
  %v484 = vadd.f32 %v377, %v483
  %485 = vmatmul.bf16.gmra.mxu0 %v437
  %v486 = vpop.f32.mrf.mxu0
  %v487 = vadd.f32 %v382, %v486
  %v488 = vpop.f32.mrf.mxu0
  %v489 = vadd.f32 %v387, %v488
  %490 = vmatmul.bf16.gmra.mxu0 %v438
  %v491 = vpop.f32.mrf.mxu0
  %v492 = vadd.f32 %v392, %v491
  %v493 = vpop.f32.mrf.mxu0
  %v494 = vadd.f32 %v397, %v493
  %495 = vdwg.mxu0
  %v496 = vmax.f32 %v457, 0.0
  %v497 = vmax.f32 %v459, 0.0
  %v498 = vmax.f32 %v462, 0.0
  %v499 = vmax.f32 %v464, 0.0
  %v500 = vmax.f32 %v467, 0.0
  %v501 = vmax.f32 %v469, 0.0
  %v502 = vmax.f32 %v472, 0.0
  %v503 = vmax.f32 %v474, 0.0
  %v504 = vmax.f32 %v477, 0.0
  %v505 = vmax.f32 %v479, 0.0
  %v506 = vmax.f32 %v482, 0.0
  %v507 = vmax.f32 %v484, 0.0
  %v508 = vmax.f32 %v487, 0.0
  %v509 = vmax.f32 %v489, 0.0
  %v510 = vmax.f32 %v492, 0.0
  %v511 = vmax.f32 %v494, 0.0
  %v512 = vpack.c.bf16 %v497, %v496
  %v513 = vpack.c.bf16 %v499, %v498
  %v514 = vpack.c.bf16 %v501, %v500
  %v515 = vpack.c.bf16 %v503, %v502
  %v516 = vpack.c.bf16 %v505, %v504
  %v517 = vpack.c.bf16 %v507, %v506
  %v518 = vpack.c.bf16 %v509, %v508
  %v519 = vpack.c.bf16 %v511, %v510
  %v520 = vld [vmem:[%s5] sm:$0xf]
  %v521 = vld [vmem:[%s6] sm:$0xff]
  %523 = vset.pattern.permute.xlu0 0
  %524 = vperm.xlu0 %523, %v521
  %v525 = vpop.permute.xlu0 %524
  %527 = vmatpush.bf16.msra.mxu0 %v519
  %528 = vmatpush.bf16.msra.mxu0 %v518
  %529 = vmatpush.bf16.msra.mxu0 %v517
  %530 = vmatpush.bf16.msra.mxu0 %v516
  %531 = vmatpush.bf16.msra.mxu0 %v515
  %532 = vmatpush.bf16.msra.mxu0 %v514
  %533 = vmatpush.bf16.msra.mxu0 %v513
  %534 = vmatpush.bf16.msra.mxu0 %v512
  %535 = vmatmul.bf16.gmra.mxu0 %v520
  %v536 = vpop.f32.mrf.mxu0
  %v537 = vadd.f32 %v525, %v536
  %v538 = vpop.f32.mrf.mxu0
  %539 = vdwg.mxu0
  %540 = vst [vmem:[%s7] sm:$0xff] %v537
  %v541 = vlaneseq
  %v542 = vshrl.u32 %v541, 7
  %vm543 = vcmp.lt.s32.totalorder %v542, 2
  %v544 = vsel %vm543, %v537, -inf
  %v545 = vrot.slane %v544, 4
  %v546 = vmax.f32 %v544, %v545
  %v547 = vrot.slane %v546, 2
  %v548 = vmax.f32 %v546, %v547
  %v549 = vrot.slane %v548, 1
  %v550 = vmax.f32 %v548, %v549
  %vm551 = vcmp.eq.f32.partialorder %v544, %v550
  %v552 = vcvt.s32.f32 %v542
  %v553 = vsel %vm551, %v552, 8.0
  %v554 = vrot.slane %v553, 4
  %v555 = vmin.f32 %v553, %v554
  %v556 = vrot.slane %v555, 2
  %v557 = vmin.f32 %v555, %v556
  %v558 = vrot.slane %v557, 1
  %v559 = vmin.f32 %v557, %v558
  %v560 = vcvt.f32.s32.to.zero.pseudo %v559
  %561 = vst [vmem:[%s8] sm:$0x1] %v560
  // Predicated region
  $region30: #{dqn_forward.1} parent=0 // pred_check
    _
  $region31: #{dqn_forward.1} parent=0 // pred_check_branch
    %563 = sbr.rel (0) target = $region33
  $region32: #{dqn_forward.1} parent=0 // pred_region
    _
  $region33: #{dqn_forward.1} parent=0 // pred_fallthru
    _
  // Predicated region
  $region34: #{dqn_forward.1} parent=0 // pred_check
    _
  $region35: #{dqn_forward.1} parent=0 // pred_check_branch
    %565 = sbr.rel (0) target = $region37
  $region36: #{dqn_forward.1} parent=0 // pred_region
    _
  $region37: #{dqn_forward.1} parent=0 // pred_fallthru
    _
  // Predicated region
  $region38: #{dqn_forward.1} parent=0 // pred_check
    _
  $region39: #{dqn_forward.1} parent=0 // pred_check_branch
    %567 = sbr.rel (0) target = $region41
  $region40: #{dqn_forward.1} parent=0 // pred_region
    _
  $region41: #{dqn_forward.1} parent=0 // pred_fallthru
    _
  // Predicated region
  $region42: #{dqn_forward.1} parent=0 // pred_check
    _
  $region43: #{dqn_forward.1} parent=0 // pred_check_branch
    %569 = sbr.rel (0) target = $region45
  $region44: #{dqn_forward.1} parent=0 // pred_region
    _
  $region45: #{dqn_forward.1} parent=0 // pred_fallthru
    _

</llo_original>
